<compile_context>
chip_gen: v6e
topology: v6e:2x2x1
jax: 0.10.0
libtpu: 0.0.40
codegen_flags: <defaults>
</compile_context>

<pallas_src>
import jax
import jax.numpy as jnp
from jax.experimental import pallas as pl
from jax.experimental.pallas import tpu as pltpu

SUBLANE = 8  # f32 sublane count


def _round_up(x, m):
    return (x + m - 1) // m * m


def mlp_kernel(x_ref, w1_ref, b1_ref, w2_ref, b2_ref, o_ref):
    # Linear 1: (TB, D_in) @ (D_in, H) + (1, H)  -- MXU, f32 accumulate.
    h = jnp.dot(x_ref[...], w1_ref[...], preferred_element_type=jnp.float32)
    # Bias + ReLU epilogue on the VPU (free slot under the MXU/DMA).
    h = jnp.maximum(h + b1_ref[...], 0.0)
    # Linear 2: (TB, H) @ (H, D_out) + (1, D_out).
    y = jnp.dot(h, w2_ref[...], preferred_element_type=jnp.float32)
    o_ref[...] = (y + b2_ref[...]).astype(o_ref.dtype)
    # Note: if xprof ever shows the narrow (D_out=8) output writeback
    # dominating, the fallback is to pack 16 output rows per 128-lane row
    # in-kernel (XLU shuffle) and reshape outside the call.


def my_sequential_forward(x, w1, b1, w2, b2, *, batch_tile=4096,
                          small_batch_threshold=512, force_pallas=False):
    """Fused Linear -> ReLU -> Linear.

    x: (B, D_in); w1: (D_in, H); b1: (H,); w2: (H, D_out); b2: (D_out,).
    Returns (B, D_out).
    """
    B, D_in = x.shape
    H = w1.shape[1]
    D_out = w2.shape[1]

    # Tiny-batch fast path: at small B the kernel is pure dispatch overhead;
    # the fused XLA dot chain is strictly faster.
    if B < small_batch_threshold and not force_pallas:
        h = jnp.maximum(x @ w1 + b1, 0.0)
        return h @ w2 + b2

    # Biases as (1, F) rows (metadata-only reshape) so they broadcast in-kernel.
    b1r = b1.reshape(1, H)
    b2r = b2.reshape(1, D_out)

    # Batch tile: multiple of 8 sublanes, capped at ~half the batch so the
    # "parallel" grid axis has >= 2 steps (v7x 2-TC sharding) when possible.
    Bpad = _round_up(B, SUBLANE)
    half = _round_up(pl.cdiv(Bpad, 2), SUBLANE)
    TB = min(_round_up(batch_tile, SUBLANE), half)
    Bp = _round_up(Bpad, TB)

    xp = x if Bp == B else jnp.zeros((Bp, D_in), x.dtype).at[:B].set(x)

    grid = (Bp // TB,)

    # Advisory cost estimate with the real (unpadded) dims.
    flops = 2 * Bp * (D_in * H + H * D_out)
    bytes_accessed = 4 * (Bp * D_in + D_in * H + H
                          + H * D_out + D_out + Bp * D_out)

    out_padded = pl.pallas_call(
        mlp_kernel,
        out_shape=jax.ShapeDtypeStruct((Bp, D_out), x.dtype),
        grid=grid,
        in_specs=[
            # Batch-tiled activations: last dim == full array dim (4), so the
            # 128-lane divisibility rule does not apply.
            pl.BlockSpec((TB, D_in), lambda i: (i, 0)),
            # Weights / biases: full-dim blocks, constant index_map -> DMA'd
            # once, VMEM-resident across all batch tiles.
            pl.BlockSpec((D_in, H), lambda i: (0, 0)),
            pl.BlockSpec((1, H), lambda i: (0, 0)),
            pl.BlockSpec((H, D_out), lambda i: (0, 0)),
            pl.BlockSpec((1, D_out), lambda i: (0, 0)),
        ],
        out_specs=pl.BlockSpec((TB, D_out), lambda i: (i, 0)),
        compiler_params=pltpu.CompilerParams(
            dimension_semantics=("parallel",)),
        cost_estimate=pl.CostEstimate(
            flops=flops, transcendentals=0, bytes_accessed=bytes_accessed),
    )(xp, w1, b1r, w2, b2r)

    return out_padded if Bp == B else out_padded[:B]


def reference_forward(x, w1, b1, w2, b2):
    h = jnp.maximum(x @ w1 + b1, 0.0)
    return h @ w2 + b2


if __name__ == "__main__":
    B, D_in, H, D_out = 2, 4, 32, 8

    key = jax.random.PRNGKey(0)
    kx, kw1, kb1, kw2, kb2, kx2 = jax.random.split(key, 6)

    # Input: matches X = torch.rand((2, 4))  (uniform [0, 1)).
    x = jax.random.uniform(kx, (B, D_in), dtype=jnp.float32)

    # Deterministic parameter init mimicking nn.Linear's U(-1/sqrt(fan_in), .)
    lim1 = 1.0 / jnp.sqrt(D_in)
    w1 = jax.random.uniform(kw1, (D_in, H), minval=-lim1, maxval=lim1,
                            dtype=jnp.float32)
    b1 = jax.random.uniform(kb1, (H,), minval=-lim1, maxval=lim1,
                            dtype=jnp.float32)
    lim2 = 1.0 / jnp.sqrt(H)
    w2 = jax.random.uniform(kw2, (H, D_out), minval=-lim2, maxval=lim2,
                            dtype=jnp.float32)
    b2 = jax.random.uniform(kb2, (D_out,), minval=-lim2, maxval=lim2,
                            dtype=jnp.float32)

    # Spec-sized input (B=2): force the Pallas path so the kernel itself runs.
    out = my_sequential_forward(x, w1, b1, w2, b2, force_pallas=True)
    out = jax.block_until_ready(out)
    ref = reference_forward(x, w1, b1, w2, b2)
    assert out.shape == (B, D_out)
    assert jnp.allclose(out, ref, atol=1e-5, rtol=1e-5), "mismatch vs reference (B=2)"

    # Larger batch exercises the multi-step "parallel" grid (>= 2 tiles).
    B2 = 1024
    x2 = jax.random.uniform(kx2, (B2, D_in), dtype=jnp.float32)
    out2 = jax.block_until_ready(
        my_sequential_forward(x2, w1, b1, w2, b2))
    ref2 = reference_forward(x2, w1, b1, w2, b2)
    assert out2.shape == (B2, D_out)
    assert jnp.allclose(out2, ref2, atol=1e-4, rtol=1e-4), "mismatch vs reference (B=1024)"

    print("KERNEL_OK")
</pallas_src>

<mosaic_0001>
module attributes {stable_mosaic.version = 11 : i64} {
  func.func @mlp_kernel(%arg0: i32, %arg1: memref<8x4xf32, #tpu.memory_space<vmem>>, %arg2: memref<4x32xf32, #tpu.memory_space<vmem>>, %arg3: memref<1x32xf32, #tpu.memory_space<vmem>>, %arg4: memref<32x8xf32, #tpu.memory_space<vmem>>, %arg5: memref<1x8xf32, #tpu.memory_space<vmem>>, %arg6: memref<8x8xf32, #tpu.memory_space<vmem>>) attributes {dimension_semantics = [#tpu.dimension_semantics<parallel>], iteration_bounds = array<i64: 1>, scalar_prefetch = 0 : i64, scratch_operands = 0 : i64, tpu.core_type = #tpu.core_type<tc>, window_params = [{transform_indices = @transform_0, window_bounds = array<i64: 8, 4>}, {pipeline_mode = #tpu.pipeline_mode<synchronous>, transform_indices = @transform_1, window_bounds = array<i64: 4, 32>}, {pipeline_mode = #tpu.pipeline_mode<synchronous>, transform_indices = @transform_2, window_bounds = array<i64: 1, 32>}, {pipeline_mode = #tpu.pipeline_mode<synchronous>, transform_indices = @transform_3, window_bounds = array<i64: 32, 8>}, {pipeline_mode = #tpu.pipeline_mode<synchronous>, transform_indices = @transform_4, window_bounds = array<i64: 1, 8>}, {transform_indices = @transform_5, window_bounds = array<i64: 8, 8>}]} {
    %c0 = arith.constant 0 : index
    %c0_0 = arith.constant 0 : index
    %0 = vector.load %arg1[%c0, %c0_0] : memref<8x4xf32, #tpu.memory_space<vmem>>, vector<8x4xf32>
    %c0_1 = arith.constant 0 : index
    %c0_2 = arith.constant 0 : index
    %1 = vector.load %arg2[%c0_1, %c0_2] : memref<4x32xf32, #tpu.memory_space<vmem>>, vector<4x32xf32>
    %cst = arith.constant dense<0.000000e+00> : vector<8x32xf32>
    %2 = tpu.matmul %0, %1, %cst {dimension_numbers = #tpu.dot_dimension_numbers<[1], [0], [0], [1], [0, 0, 1, 1], [], []>} : vector<8x4xf32>, vector<4x32xf32>, vector<8x32xf32> -> vector<8x32xf32>
    %c0_3 = arith.constant 0 : index
    %c0_4 = arith.constant 0 : index
    %3 = vector.load %arg3[%c0_3, %c0_4] : memref<1x32xf32, #tpu.memory_space<vmem>>, vector<1x32xf32>
    %4 = vector.broadcast %3 : vector<1x32xf32> to vector<8x32xf32>
    %5 = arith.addf %2, %4 : vector<8x32xf32>
    %cst_5 = arith.constant 0.000000e+00 : f32
    %6 = vector.broadcast %cst_5 : f32 to vector<8x32xf32>
    %7 = arith.maximumf %5, %6 : vector<8x32xf32>
    %c0_6 = arith.constant 0 : index
    %c0_7 = arith.constant 0 : index
    %8 = vector.load %arg4[%c0_6, %c0_7] : memref<32x8xf32, #tpu.memory_space<vmem>>, vector<32x8xf32>
    %cst_8 = arith.constant dense<0.000000e+00> : vector<8x8xf32>
    %9 = tpu.matmul %7, %8, %cst_8 {dimension_numbers = #tpu.dot_dimension_numbers<[1], [0], [0], [1], [0, 0, 1, 1], [], []>} : vector<8x32xf32>, vector<32x8xf32>, vector<8x8xf32> -> vector<8x8xf32>
    %c0_9 = arith.constant 0 : index
    %c0_10 = arith.constant 0 : index
    %10 = vector.load %arg5[%c0_9, %c0_10] : memref<1x8xf32, #tpu.memory_space<vmem>>, vector<1x8xf32>
    %11 = vector.broadcast %10 : vector<1x8xf32> to vector<8x8xf32>
    %12 = arith.addf %9, %11 : vector<8x8xf32>
    %c0_11 = arith.constant 0 : index
    %c0_12 = arith.constant 0 : index
    %13 = vector.load %arg6[%c0_11, %c0_12] : memref<8x8xf32, #tpu.memory_space<vmem>>, vector<8x8xf32>
    tpu.vector_store %arg6[%c0_11, %c0_12], %12 {strides = array<i32>} : memref<8x8xf32, #tpu.memory_space<vmem>>, vector<8x8xf32>,
    return
  }
  func.func @transform_0(%arg0: i32) -> (i32, i32) {
    %c0_i32 = arith.constant 0 : i32
    %c0_i32_0 = arith.constant 0 : i32
    return %arg0, %c0_i32 : i32, i32
  }
  func.func @transform_1(%arg0: i32) -> (i32, i32) {
    %c0_i32 = arith.constant 0 : i32
    %c0_i32_0 = arith.constant 0 : i32
    %c0_i32_1 = arith.constant 0 : i32
    return %c0_i32, %c0_i32_0 : i32, i32
  }
  func.func @transform_2(%arg0: i32) -> (i32, i32) {
    %c0_i32 = arith.constant 0 : i32
    %c0_i32_0 = arith.constant 0 : i32
    %c0_i32_1 = arith.constant 0 : i32
    return %c0_i32, %c0_i32_0 : i32, i32
  }
  func.func @transform_3(%arg0: i32) -> (i32, i32) {
    %c0_i32 = arith.constant 0 : i32
    %c0_i32_0 = arith.constant 0 : i32
    %c0_i32_1 = arith.constant 0 : i32
    return %c0_i32, %c0_i32_0 : i32, i32
  }
  func.func @transform_4(%arg0: i32) -> (i32, i32) {
    %c0_i32 = arith.constant 0 : i32
    %c0_i32_0 = arith.constant 0 : i32
    %c0_i32_1 = arith.constant 0 : i32
    return %c0_i32, %c0_i32_0 : i32, i32
  }
  func.func @transform_5(%arg0: i32) -> (i32, i32) {
    %c0_i32 = arith.constant 0 : i32
    %c0_i32_0 = arith.constant 0 : i32
    return %arg0, %c0_i32 : i32, i32
  }
}

</mosaic_0001>

<llo_original>
// kernel: tpu_custom_call.1
$region0: #{tpu_custom_call.1}
  #allocation0 [shape = 'u32[]', space=smem, size = 0x4, offset = 0x4, fixed_abs, tag = 'smem constant byte address 0x4 - core index']
  #allocation1 [shape = 'u32[144,128]{1,0:T(1,128)}', space=vmem, size = 0x12000, scoped, tag = 'internal scratch']
  %s0 = inlined_call_operand.vmem [shape: f32[8,4], index: 0, kind: input, shape index: {}]
  %s1 = inlined_call_operand.vmem [shape: f32[4,32], index: 1, kind: input, shape index: {}]
  %s2 = inlined_call_operand.vmem [shape: f32[1,32], index: 2, kind: input, shape index: {}]
  %s3 = inlined_call_operand.vmem [shape: f32[32,8], index: 3, kind: input, shape index: {}]
  %s4 = inlined_call_operand.vmem [shape: f32[1,8], index: 4, kind: input, shape index: {}]
  %s5 = inlined_call_operand.hbm [shape: f32[8,8], index: 5, kind: output, shape index: {}]
  %s6 = sld [smem:[#allocation0]]
  $region30: #{tpu_custom_call.1} parent=0
    _
  %s8 = ssub.s32 1, %s6
  %s9 = scalar_select 0, %s8, %s6
  $region1: #{tpu_custom_call.1} parent=0
    #allocation2 [shape = 'u8[4096]{0}', space=vmem, size = 0x1000, scoped, tag = 'output window, operand 0, single buffered']
    #allocation3 [shape = 's32[1]{0}', space=sflag, size = 0x4, scoped, tag = 'scoped memory for tpu_custom_call.1']
    %10 = vsyncpa [#allocation3], 0
    // Predicated region
    $region2: #{tpu_custom_call.1} parent=1 // pred_check
      _
    $region3: #{tpu_custom_call.1} parent=1 // pred_check_branch
      %12 = sbr.rel (0) target = $region5
    $region4: #{tpu_custom_call.1} parent=1 // pred_region
      _
    $region5: #{tpu_custom_call.1} parent=1 // pred_fallthru
      _
    // Predicated region
    $region6: #{tpu_custom_call.1} parent=1 // pred_check
      _
    $region7: #{tpu_custom_call.1} parent=1 // pred_check_branch
      %14 = sbr.rel (0) target = $region9
    $region8: #{tpu_custom_call.1} parent=1 // pred_region
      _
    $region9: #{tpu_custom_call.1} parent=1 // pred_fallthru
      _
    // Predicated region
    $region10: #{tpu_custom_call.1} parent=1 // pred_check
      _
    $region11: #{tpu_custom_call.1} parent=1 // pred_check_branch
      %16 = sbr.rel (0) target = $region13
    $region12: #{tpu_custom_call.1} parent=1 // pred_region
      _
    $region13: #{tpu_custom_call.1} parent=1 // pred_fallthru
      _
    // Predicated region
    $region14: #{tpu_custom_call.1} parent=1 // pred_check
      _
    $region15: #{tpu_custom_call.1} parent=1 // pred_check_branch
      %18 = sbr.rel (0) target = $region17
    $region16: #{tpu_custom_call.1} parent=1 // pred_region
      _
    $region17: #{tpu_custom_call.1} parent=1 // pred_fallthru
      _
    // Predicated region
    $region18: #{tpu_custom_call.1} parent=1 // pred_check
      _
    $region19: #{tpu_custom_call.1} parent=1 // pred_check_branch
      %20 = sbr.rel (0) target = $region21
    $region20: #{tpu_custom_call.1} parent=1 // pred_region
      _
    $region21: #{tpu_custom_call.1} parent=1 // pred_fallthru
      _
    %v21 = vld [vmem:[%s0] sm:$0xff]
    %v22 = vld [vmem:[%s1] sm:$0xf]
    %v23 = vld [vmem:[%s2] sm:$0x1]
    %v25 = vlaneseq
    %v26 = vshrl.u32 %v25, 7
    %v27 = vsub.s32 0, %v26
    %v28 = vrot.slane %v23, %v27
    %vm30 = vcmask 31744
    %v32 = vsel %vm30, %v21, 0
    %vm34 = vcmask 1043456
    %v36 = vsel %vm34, %v22, 0
    %38 = vmatprep.subr.mxu0 0.0
    %39 = vmatpush1.msra.mxu0 0.0
    %40 = vmatprep.subr.mxu0 0.0
    %41 = vmatpush1.msra.mxu0 0.0
    %42 = vmatprep.subr.mxu0 0.0
    %43 = vmatpush1.msra.mxu0 0.0
    %44 = vmatprep.subr.mxu0 0.0
    %45 = vmatpush1.msra.mxu0 0.0
    %46 = vmatprep.subr.mxu0 0.0
    %47 = vmatpush1.msra.mxu0 0.0
    %48 = vmatprep.subr.mxu0 0.0
    %49 = vmatpush1.msra.mxu0 0.0
    %50 = vmatprep.subr.mxu0 0.0
    %51 = vmatpush1.msra.mxu0 0.0
    %52 = vmatprep.subr.mxu0 0.0
    %53 = vmatpush1.msra.mxu0 0.0
    %54 = vmatprep.subr.mxu0 0.0
    %55 = vmatpush1.msra.mxu0 0.0
    %56 = vmatprep.subr.mxu0 0.0
    %57 = vmatpush1.msra.mxu0 0.0
    %58 = vmatprep.subr.mxu0 0.0
    %59 = vmatpush1.msra.mxu0 0.0
    %60 = vmatprep.subr.mxu0 0.0
    %61 = vmatpush1.msra.mxu0 0.0
    %62 = vmatprep.subr.mxu0 0.0
    %63 = vmatpush1.msra.mxu0 0.0
    %64 = vmatprep.subr.mxu0 0.0
    %65 = vmatpush1.msra.mxu0 0.0
    %66 = vmatprep.subr.mxu0 0.0
    %67 = vmatpush1.msra.mxu0 0.0
    %68 = vmatprep.subr.mxu0 0.0
    %69 = vmatpush1.msra.mxu0 %v36
    %70 = vmatprep.subr.mxu0 0.0
    %71 = vmatpush2.msra.mxu0 0.0
    %72 = vmatprep.subr.mxu0 0.0
    %73 = vmatpush2.msra.mxu0 0.0
    %74 = vmatprep.subr.mxu0 0.0
    %75 = vmatpush2.msra.mxu0 0.0
    %76 = vmatprep.subr.mxu0 0.0
    %77 = vmatpush2.msra.mxu0 0.0
    %78 = vmatprep.subr.mxu0 0.0
    %79 = vmatpush2.msra.mxu0 0.0
    %80 = vmatprep.subr.mxu0 0.0
    %81 = vmatpush2.msra.mxu0 0.0
    %82 = vmatprep.subr.mxu0 0.0
    %83 = vmatpush2.msra.mxu0 0.0
    %84 = vmatprep.subr.mxu0 0.0
    %85 = vmatpush2.msra.mxu0 0.0
    %86 = vmatprep.subr.mxu0 0.0
    %87 = vmatpush2.msra.mxu0 0.0
    %88 = vmatprep.subr.mxu0 0.0
    %89 = vmatpush2.msra.mxu0 0.0
    %90 = vmatprep.subr.mxu0 0.0
    %91 = vmatpush2.msra.mxu0 0.0
    %92 = vmatprep.subr.mxu0 0.0
    %93 = vmatpush2.msra.mxu0 0.0
    %94 = vmatprep.subr.mxu0 0.0
    %95 = vmatpush2.msra.mxu0 0.0
    %96 = vmatprep.subr.mxu0 0.0
    %97 = vmatpush2.msra.mxu0 0.0
    %98 = vmatprep.subr.mxu0 0.0
    %99 = vmatpush2.msra.mxu0 0.0
    %100 = vmatprep.subr.mxu0 0.0
    %101 = vmatpush2.msra.mxu0 0.0
    %102 = vmatprep.mubr.f32.mxu0 0.0
    %103 = vmatmul.mubr.f32.gmra.mxu0 %v32
    %v104 = vpop.f32.mrf.mxu0
    %v105 = vadd.f32 %v28, %v104
    %v106 = vpop.f32.mrf.mxu0
    %107 = vdwg.mxu0
    %v108 = vmax.f32 %v105, 0.0
    %v109 = vld [vmem:[%s3] sm:$0xff]
    %v110 = vld [vmem:[%s3 + $0x8] sm:$0xff]
    %v111 = vld [vmem:[%s3 + $0x10] sm:$0xff]
    %v112 = vld [vmem:[%s3 + $0x18] sm:$0xff]
    %v113 = vld [vmem:[%s4] sm:$0x1]
    %v115 = vlaneseq
    %v116 = vshrl.u32 %v115, 7
    %v117 = vsub.s32 0, %v116
    %v118 = vrot.slane %v113, %v117
    %vm120 = vcmask 261120
    %v122 = vsel %vm120, %v108, 0
    %124 = vmatprep.subr.mxu0 0.0
    %125 = vmatpush1.msra.mxu0 0.0
    %126 = vmatprep.subr.mxu0 0.0
    %127 = vmatpush1.msra.mxu0 0.0
    %128 = vmatprep.subr.mxu0 0.0
    %129 = vmatpush1.msra.mxu0 0.0
    %130 = vmatprep.subr.mxu0 0.0
    %131 = vmatpush1.msra.mxu0 0.0
    %132 = vmatprep.subr.mxu0 0.0
    %133 = vmatpush1.msra.mxu0 0.0
    %134 = vmatprep.subr.mxu0 0.0
    %135 = vmatpush1.msra.mxu0 0.0
    %136 = vmatprep.subr.mxu0 0.0
    %137 = vmatpush1.msra.mxu0 0.0
    %138 = vmatprep.subr.mxu0 0.0
    %139 = vmatpush1.msra.mxu0 0.0
    %140 = vmatprep.subr.mxu0 0.0
    %141 = vmatpush1.msra.mxu0 0.0
    %142 = vmatprep.subr.mxu0 0.0
    %143 = vmatpush1.msra.mxu0 0.0
    %144 = vmatprep.subr.mxu0 0.0
    %145 = vmatpush1.msra.mxu0 0.0
    %146 = vmatprep.subr.mxu0 0.0
    %147 = vmatpush1.msra.mxu0 0.0
    %148 = vmatprep.subr.mxu0 0.0
    %149 = vmatpush1.msra.mxu0 %v112
    %150 = vmatprep.subr.mxu0 0.0
    %151 = vmatpush1.msra.mxu0 %v111
    %152 = vmatprep.subr.mxu0 0.0
    %153 = vmatpush1.msra.mxu0 %v110
    %154 = vmatprep.subr.mxu0 0.0
    %155 = vmatpush1.msra.mxu0 %v109
    %156 = vmatprep.subr.mxu0 0.0
    %157 = vmatpush2.msra.mxu0 0.0
    %158 = vmatprep.subr.mxu0 0.0
    %159 = vmatpush2.msra.mxu0 0.0
    %160 = vmatprep.subr.mxu0 0.0
    %161 = vmatpush2.msra.mxu0 0.0
    %162 = vmatprep.subr.mxu0 0.0
    %163 = vmatpush2.msra.mxu0 0.0
    %164 = vmatprep.subr.mxu0 0.0
    %165 = vmatpush2.msra.mxu0 0.0
    %166 = vmatprep.subr.mxu0 0.0
    %167 = vmatpush2.msra.mxu0 0.0
    %168 = vmatprep.subr.mxu0 0.0
    %169 = vmatpush2.msra.mxu0 0.0
    %170 = vmatprep.subr.mxu0 0.0
    %171 = vmatpush2.msra.mxu0 0.0
    %172 = vmatprep.subr.mxu0 0.0
    %173 = vmatpush2.msra.mxu0 0.0
    %174 = vmatprep.subr.mxu0 0.0
    %175 = vmatpush2.msra.mxu0 0.0
    %176 = vmatprep.subr.mxu0 0.0
    %177 = vmatpush2.msra.mxu0 0.0
    %178 = vmatprep.subr.mxu0 0.0
    %179 = vmatpush2.msra.mxu0 0.0
    %180 = vmatprep.subr.mxu0 0.0
    %181 = vmatpush2.msra.mxu0 0.0
    %182 = vmatprep.subr.mxu0 0.0
    %183 = vmatpush2.msra.mxu0 0.0
    %184 = vmatprep.subr.mxu0 0.0
    %185 = vmatpush2.msra.mxu0 0.0
    %186 = vmatprep.subr.mxu0 0.0
    %187 = vmatpush2.msra.mxu0 0.0
    %188 = vmatprep.mubr.f32.mxu0 0.0
    %189 = vmatmul.mubr.f32.gmra.mxu0 %v122
    %v190 = vpop.f32.mrf.mxu0
    %v191 = vadd.f32 %v118, %v190
    %v192 = vpop.f32.mrf.mxu0
    %193 = vdwg.mxu0
    %vm194 = vcmask 64512
    %195 = vst.msk [vmem:[#allocation2] sm:$0xff] %vm194, %v191
    // Predicated region
    $region22: #{tpu_custom_call.1} parent=1 // pred_check
      _
    $region23: #{tpu_custom_call.1} parent=1 // pred_check_branch
      %197 = sbr.rel (0) target = $region25
    $region24: #{tpu_custom_call.1} parent=1 // pred_region
      %s199 = ssub.s32 128, 128
      %200 = vsyncadd [#allocation3], %s199
      %s202 = sshll.u32 [#allocation2], 4
      %s203 = int_to_ptr.vmem [resolvable:$true] %s202
      %205 = dma.vmem_to_hbm [thread:$0]  %s203, 128, %s5, [#allocation3]
    $region25: #{tpu_custom_call.1} parent=1 // pred_fallthru
      _
    // Predicated region
    $region26: #{tpu_custom_call.1} parent=1 // pred_check
      _
    $region27: #{tpu_custom_call.1} parent=1 // pred_check_branch
      %207 = sbr.rel (0) target = $region29
    $region28: #{tpu_custom_call.1} parent=1 // pred_region
      %208 = dma.done [#allocation3], 128
    $region29: #{tpu_custom_call.1} parent=1 // pred_fallthru
      _
    %209 = vsyncpa [#allocation3], 1

</llo_original>
